<compile_context>
chip_gen: v7x
topology: tpu7x:2x2x1
jax: 0.10.0
libtpu: 0.0.40
codegen_flags: <defaults>
</compile_context>

<pallas_src>
import jax
import jax.numpy as jnp
from jax.experimental import pallas as pl
from jax.experimental.pallas import tpu as pltpu

IN_FEATURES = 342
OUT_FEATURES = 311
HIDDEN = 32
NUM_CTRL = 4          # phase control points for the Catmull-Rom spline
MAX_TILE_B = 1024     # max batch rows per grid step


def _round_up(n, m):
    return ((n + m - 1) // m) * m


def _elu(v):
    # ELU(alpha=1): x if x > 0 else exp(x) - 1 (f32; exp rides the EUP slot).
    return jnp.where(v > 0.0, v, jnp.exp(jnp.minimum(v, 0.0)) - 1.0)


def pfnn_kernel(alpha_ref, x_ref, w1_ref, b1_ref, w2_ref, b2_ref, w3_ref, o_ref):
    """One batch tile per invocation (all operands already in VMEM).

    alpha_ref : (TB, 4)          per-example control-point blend weights (f32)
    x_ref     : (TB, 342)        network inputs
    w1_ref    : (342, 128) bf16  [W1_0 | W1_1 | W1_2 | W1_3]   (N-stacked)
    b1_ref    : (1, 128)   f32   [b1_0 | b1_1 | b1_2 | b1_3]
    w2_ref    : (32, 128)  bf16  [W2_0 | W2_1 | W2_2 | W2_3]   (N-stacked)
    b2_ref    : (1, 128)   f32   [b2_0 | b2_1 | b2_2 | b2_3]
    w3_ref    : (132, 311) bf16  [b3_0..b3_3 ; W3_0 ; W3_1 ; W3_2 ; W3_3] (K-stacked)
    o_ref     : (TB, 311)
    """
    alpha = alpha_ref[...]                                      # (TB, 4) f32
    tb = alpha.shape[0]
    # Hoist the 4 lane-broadcasts of the blend coefficients (each reused 3x).
    a_w = [jnp.broadcast_to(alpha[:, j:j + 1], (tb, HIDDEN)) for j in range(NUM_CTRL)]

    def blend(cand):
        # cand (TB, 4*HIDDEN) f32, lane group j belongs to control point j:
        #   sum_j alpha_j * cand[:, j*H:(j+1)*H]
        h = a_w[0] * cand[:, :HIDDEN]
        for j in range(1, NUM_CTRL):
            h = h + a_w[j] * cand[:, j * HIDDEN:(j + 1) * HIDDEN]
        return h                                                # (TB, HIDDEN) f32

    xb = x_ref[...].astype(jnp.bfloat16)                        # (TB, 342) bf16

    # Layer 1: one N-stacked bf16 matmul (K=342, N=128), bias as broadcast add.
    cand1 = jnp.dot(xb, w1_ref[...], preferred_element_type=jnp.float32) + b1_ref[...]
    h1 = _elu(blend(cand1))                                     # (TB, 32) f32

    # Layer 2: same structure (K=32, N=128).
    cand2 = jnp.dot(h1.astype(jnp.bfloat16), w2_ref[...],
                    preferred_element_type=jnp.float32) + b2_ref[...]
    h2 = _elu(blend(cand2))                                     # (TB, 32) f32

    # Layer 3: K-stacked, bias folded in via the leading alpha columns.
    stacked = jnp.concatenate(
        [alpha] + [a_w[j] * h2 for j in range(NUM_CTRL)], axis=-1)   # (TB, 132) f32
    y = jnp.dot(stacked.astype(jnp.bfloat16), w3_ref[...],
                preferred_element_type=jnp.float32)             # (TB, 311) f32
    o_ref[...] = y.astype(o_ref.dtype)


def _catmull_rom_alpha(p):
    """Per-example blend coefficients alpha (B, 4) over the 4 control points."""
    p = jnp.asarray(p, jnp.float32)
    ps = (p % 1.0) * NUM_CTRL
    k1 = jnp.floor(ps).astype(jnp.int32) % NUM_CTRL
    w = ps - jnp.floor(ps)
    ww, www = w * w, w * w * w
    basis = jnp.stack([
        -0.5 * w + ww - 0.5 * www,
        1.0 - 2.5 * ww + 1.5 * www,
        0.5 * w + 2.0 * ww - 1.5 * www,
        -0.5 * ww + 0.5 * www,
    ], axis=-1)                                                   # (B, 4)
    idx = (k1[:, None] + jnp.arange(-1, 3)[None, :]) % NUM_CTRL   # (B, 4)
    onehot = jax.nn.one_hot(idx, NUM_CTRL, dtype=jnp.float32)     # (B, 4, 4)
    return jnp.einsum('bn,bnk->bk', basis, onehot)                # (B, 4)


def pack_params(params):
    """Pack raw per-control-point weights into the kernel layout.

    Call ONCE (outside the jitted forward) so per-call latency carries no
    weight reshuffling.  Weights -> bf16, biases stay f32 (added in f32),
    layer-3 biases are folded into the bf16 weight stack.
    """
    w1, b1, w2, b2, w3, b3 = (jnp.asarray(a, jnp.float32) for a in params)
    w1cat = jnp.concatenate([w1[j] for j in range(NUM_CTRL)], axis=1).astype(jnp.bfloat16)
    b1cat = b1.reshape(1, NUM_CTRL * HIDDEN)                               # (1, 128) f32
    w2cat = jnp.concatenate([w2[j] for j in range(NUM_CTRL)], axis=1).astype(jnp.bfloat16)
    b2cat = b2.reshape(1, NUM_CTRL * HIDDEN)                               # (1, 128) f32
    w3full = jnp.concatenate(
        [b3.reshape(NUM_CTRL, OUT_FEATURES)] + [w3[j] for j in range(NUM_CTRL)],
        axis=0).astype(jnp.bfloat16)                                       # (132, 311)
    return w1cat, b1cat, w2cat, b2cat, w3full


def _pick_batch_tile(batch):
    if batch <= 8:
        return batch                       # single full-extent block (always legal)
    # Aim for >= 2 grid steps (v7x has 2 TensorCores), tile a multiple of 8,
    # capped at MAX_TILE_B; this also keeps dead rows in the last tile minimal.
    half = -(-batch // 2)
    return min(MAX_TILE_B, _round_up(half, 8))


@jax.jit
def char_control_forward(p, x, packed):
    w1cat, b1cat, w2cat, b2cat, w3full = packed
    batch = x.shape[0]
    alpha = _catmull_rom_alpha(p)                         # (B, 4) tiny scalar glue
    tb = _pick_batch_tile(batch)
    num_tiles = -(-batch // tb)

    def resident(shape):
        # Constant index_map -> fetched into VMEM once, stays resident across tiles.
        return pl.BlockSpec(shape, lambda i: (0,) * len(shape))

    return pl.pallas_call(
        pfnn_kernel,
        out_shape=jax.ShapeDtypeStruct((batch, OUT_FEATURES), jnp.float32),
        grid=(num_tiles,),
        in_specs=[
            pl.BlockSpec((tb, NUM_CTRL), lambda i: (i, 0)),          # alpha
            pl.BlockSpec((tb, IN_FEATURES), lambda i: (i, 0)),       # x (unpadded)
            resident(w1cat.shape),                                   # (342, 128)
            resident(b1cat.shape),                                   # (1, 128)
            resident(w2cat.shape),                                   # (32, 128)
            resident(b2cat.shape),                                   # (1, 128)
            resident(w3full.shape),                                  # (132, 311)
        ],
        out_specs=pl.BlockSpec((tb, OUT_FEATURES), lambda i: (i, 0)),
        compiler_params=pltpu.CompilerParams(
            dimension_semantics=("parallel",)),
    )(alpha, x, w1cat, b1cat, w2cat, b2cat, w3full)


def reference_forward(p, x, params):
    """Pure-JAX f32 reference (per-example blended weights) for correctness."""
    w1, b1, w2, b2, w3, b3 = params
    alpha = _catmull_rom_alpha(p)
    x = x.astype(jnp.float32)

    def layer(inp, W, b):
        Wb = jnp.einsum('bk,kio->bio', alpha, W)           # (B, din, dout)
        bb = jnp.einsum('bk,kio->bio', alpha, b)[:, 0]     # (B, dout)
        return jnp.einsum('bi,bio->bo', inp, Wb) + bb

    h1 = _elu(layer(x, w1, b1))
    h2 = _elu(layer(h1, w2, b2))
    return layer(h2, w3, b3)


def init_params(key):
    k = jax.random.split(key, 6)
    scale = 0.05
    w1 = scale * jax.random.normal(k[0], (NUM_CTRL, IN_FEATURES, HIDDEN), jnp.float32)
    b1 = scale * jax.random.normal(k[1], (NUM_CTRL, 1, HIDDEN), jnp.float32)
    w2 = scale * jax.random.normal(k[2], (NUM_CTRL, HIDDEN, HIDDEN), jnp.float32)
    b2 = scale * jax.random.normal(k[3], (NUM_CTRL, 1, HIDDEN), jnp.float32)
    w3 = scale * jax.random.normal(k[4], (NUM_CTRL, HIDDEN, OUT_FEATURES), jnp.float32)
    b3 = scale * jax.random.normal(k[5], (NUM_CTRL, 1, OUT_FEATURES), jnp.float32)
    return (w1, b1, w2, b2, w3, b3)


if __name__ == "__main__":
    key = jax.random.PRNGKey(0)
    k_param, k_p, k_x = jax.random.split(key, 3)

    batch = 8
    params = init_params(k_param)
    packed = pack_params(params)          # one-time weight packing (hoisted)
    p = jax.random.uniform(k_p, (batch,), jnp.float32)               # phases [0,1)
    x = jax.random.normal(k_x, (batch, IN_FEATURES), jnp.float32)    # (B, 342)

    y = jax.block_until_ready(char_control_forward(p, x, packed))
    y_ref = jax.block_until_ready(reference_forward(p, x, params))

    assert y.shape == (batch, OUT_FEATURES), y.shape
    assert jnp.allclose(y, y_ref, atol=1e-2, rtol=1e-2), \
        float(jnp.max(jnp.abs(y - y_ref)))

    print("KERNEL_OK")
</pallas_src>

<mosaic_0001>
module attributes {stable_mosaic.version = 11 : i64} {
  func.func @pfnn_kernel(%arg0: i32, %arg1: memref<8x4xf32, #tpu.memory_space<vmem>>, %arg2: memref<8x342xf32, #tpu.memory_space<vmem>>, %arg3: memref<342x128xbf16, #tpu.memory_space<vmem>>, %arg4: memref<1x128xf32, #tpu.memory_space<vmem>>, %arg5: memref<32x128xbf16, #tpu.memory_space<vmem>>, %arg6: memref<1x128xf32, #tpu.memory_space<vmem>>, %arg7: memref<132x311xbf16, #tpu.memory_space<vmem>>, %arg8: memref<8x311xf32, #tpu.memory_space<vmem>>) attributes {dimension_semantics = [#tpu.dimension_semantics<parallel>], iteration_bounds = array<i64: 1>, scalar_prefetch = 0 : i64, scratch_operands = 0 : i64, tpu.core_type = #tpu.core_type<tc>, window_params = [{transform_indices = @transform_0, window_bounds = array<i64: 8, 4>}, {transform_indices = @transform_1, window_bounds = array<i64: 8, 342>}, {pipeline_mode = #tpu.pipeline_mode<synchronous>, transform_indices = @transform_2, window_bounds = array<i64: 342, 128>}, {pipeline_mode = #tpu.pipeline_mode<synchronous>, transform_indices = @transform_3, window_bounds = array<i64: 1, 128>}, {pipeline_mode = #tpu.pipeline_mode<synchronous>, transform_indices = @transform_4, window_bounds = array<i64: 32, 128>}, {pipeline_mode = #tpu.pipeline_mode<synchronous>, transform_indices = @transform_5, window_bounds = array<i64: 1, 128>}, {pipeline_mode = #tpu.pipeline_mode<synchronous>, transform_indices = @transform_6, window_bounds = array<i64: 132, 311>}, {transform_indices = @transform_7, window_bounds = array<i64: 8, 311>}]} {
    %c0 = arith.constant 0 : index
    %c0_0 = arith.constant 0 : index
    %0 = vector.load %arg1[%c0, %c0_0] : memref<8x4xf32, #tpu.memory_space<vmem>>, vector<8x4xf32>
    %1 = vector.extract_strided_slice %0 {offsets = [0, 0], sizes = [8, 1], strides = [1, 1]} : vector<8x4xf32> to vector<8x1xf32>
    %2 = vector.shape_cast %1 : vector<8x1xf32> to vector<8x1xf32>
    %3 = vector.broadcast %2 : vector<8x1xf32> to vector<8x32xf32>
    %4 = vector.extract_strided_slice %0 {offsets = [0, 1], sizes = [8, 1], strides = [1, 1]} : vector<8x4xf32> to vector<8x1xf32>
    %5 = vector.shape_cast %4 : vector<8x1xf32> to vector<8x1xf32>
    %6 = vector.broadcast %5 : vector<8x1xf32> to vector<8x32xf32>
    %7 = vector.extract_strided_slice %0 {offsets = [0, 2], sizes = [8, 1], strides = [1, 1]} : vector<8x4xf32> to vector<8x1xf32>
    %8 = vector.shape_cast %7 : vector<8x1xf32> to vector<8x1xf32>
    %9 = vector.broadcast %8 : vector<8x1xf32> to vector<8x32xf32>
    %10 = vector.extract_strided_slice %0 {offsets = [0, 3], sizes = [8, 1], strides = [1, 1]} : vector<8x4xf32> to vector<8x1xf32>
    %11 = vector.shape_cast %10 : vector<8x1xf32> to vector<8x1xf32>
    %12 = vector.broadcast %11 : vector<8x1xf32> to vector<8x32xf32>
    %c0_1 = arith.constant 0 : index
    %c0_2 = arith.constant 0 : index
    %13 = vector.load %arg2[%c0_1, %c0_2] : memref<8x342xf32, #tpu.memory_space<vmem>>, vector<8x342xf32>
    %14 = arith.truncf %13 : vector<8x342xf32> to vector<8x342xbf16>
    %c0_3 = arith.constant 0 : index
    %c0_4 = arith.constant 0 : index
    %15 = vector.load %arg3[%c0_3, %c0_4] : memref<342x128xbf16, #tpu.memory_space<vmem>>, vector<342x128xbf16>
    %cst = arith.constant dense<0.000000e+00> : vector<8x128xf32>
    %16 = tpu.matmul %14, %15, %cst {dimension_numbers = #tpu.dot_dimension_numbers<[1], [0], [0], [1], [0, 0, 1, 1], [], []>} : vector<8x342xbf16>, vector<342x128xbf16>, vector<8x128xf32> -> vector<8x128xf32>
    %c0_5 = arith.constant 0 : index
    %c0_6 = arith.constant 0 : index
    %17 = vector.load %arg4[%c0_5, %c0_6] : memref<1x128xf32, #tpu.memory_space<vmem>>, vector<1x128xf32>
    %18 = vector.broadcast %17 : vector<1x128xf32> to vector<8x128xf32>
    %19 = arith.addf %16, %18 : vector<8x128xf32>
    %20 = vector.extract_strided_slice %19 {offsets = [0, 0], sizes = [8, 32], strides = [1, 1]} : vector<8x128xf32> to vector<8x32xf32>
    %21 = arith.mulf %3, %20 : vector<8x32xf32>
    %22 = vector.extract_strided_slice %19 {offsets = [0, 32], sizes = [8, 32], strides = [1, 1]} : vector<8x128xf32> to vector<8x32xf32>
    %23 = arith.mulf %6, %22 : vector<8x32xf32>
    %24 = arith.addf %21, %23 : vector<8x32xf32>
    %25 = vector.extract_strided_slice %19 {offsets = [0, 64], sizes = [8, 32], strides = [1, 1]} : vector<8x128xf32> to vector<8x32xf32>
    %26 = arith.mulf %9, %25 : vector<8x32xf32>
    %27 = arith.addf %24, %26 : vector<8x32xf32>
    %28 = vector.extract_strided_slice %19 {offsets = [0, 96], sizes = [8, 32], strides = [1, 1]} : vector<8x128xf32> to vector<8x32xf32>
    %29 = arith.mulf %12, %28 : vector<8x32xf32>
    %30 = arith.addf %27, %29 : vector<8x32xf32>
    %cst_7 = arith.constant 0.000000e+00 : f32
    %31 = vector.broadcast %cst_7 : f32 to vector<8x32xf32>
    %32 = arith.cmpf ogt, %30, %31 : vector<8x32xf32>
    %cst_8 = arith.constant 0.000000e+00 : f32
    %33 = vector.broadcast %cst_8 : f32 to vector<8x32xf32>
    %34 = arith.minimumf %30, %33 : vector<8x32xf32>
    %35 = math.exp %34 : vector<8x32xf32>
    %cst_9 = arith.constant 1.000000e+00 : f32
    %36 = vector.broadcast %cst_9 : f32 to vector<8x32xf32>
    %37 = arith.subf %35, %36 : vector<8x32xf32>
    %38 = arith.select %32, %30, %37 : vector<8x32xi1>, vector<8x32xf32>
    %39 = arith.truncf %38 : vector<8x32xf32> to vector<8x32xbf16>
    %c0_10 = arith.constant 0 : index
    %c0_11 = arith.constant 0 : index
    %40 = vector.load %arg5[%c0_10, %c0_11] : memref<32x128xbf16, #tpu.memory_space<vmem>>, vector<32x128xbf16>
    %cst_12 = arith.constant dense<0.000000e+00> : vector<8x128xf32>
    %41 = tpu.matmul %39, %40, %cst_12 {dimension_numbers = #tpu.dot_dimension_numbers<[1], [0], [0], [1], [0, 0, 1, 1], [], []>} : vector<8x32xbf16>, vector<32x128xbf16>, vector<8x128xf32> -> vector<8x128xf32>
    %c0_13 = arith.constant 0 : index
    %c0_14 = arith.constant 0 : index
    %42 = vector.load %arg6[%c0_13, %c0_14] : memref<1x128xf32, #tpu.memory_space<vmem>>, vector<1x128xf32>
    %43 = vector.broadcast %42 : vector<1x128xf32> to vector<8x128xf32>
    %44 = arith.addf %41, %43 : vector<8x128xf32>
    %45 = vector.extract_strided_slice %44 {offsets = [0, 0], sizes = [8, 32], strides = [1, 1]} : vector<8x128xf32> to vector<8x32xf32>
    %46 = arith.mulf %3, %45 : vector<8x32xf32>
    %47 = vector.extract_strided_slice %44 {offsets = [0, 32], sizes = [8, 32], strides = [1, 1]} : vector<8x128xf32> to vector<8x32xf32>
    %48 = arith.mulf %6, %47 : vector<8x32xf32>
    %49 = arith.addf %46, %48 : vector<8x32xf32>
    %50 = vector.extract_strided_slice %44 {offsets = [0, 64], sizes = [8, 32], strides = [1, 1]} : vector<8x128xf32> to vector<8x32xf32>
    %51 = arith.mulf %9, %50 : vector<8x32xf32>
    %52 = arith.addf %49, %51 : vector<8x32xf32>
    %53 = vector.extract_strided_slice %44 {offsets = [0, 96], sizes = [8, 32], strides = [1, 1]} : vector<8x128xf32> to vector<8x32xf32>
    %54 = arith.mulf %12, %53 : vector<8x32xf32>
    %55 = arith.addf %52, %54 : vector<8x32xf32>
    %cst_15 = arith.constant 0.000000e+00 : f32
    %56 = vector.broadcast %cst_15 : f32 to vector<8x32xf32>
    %57 = arith.cmpf ogt, %55, %56 : vector<8x32xf32>
    %cst_16 = arith.constant 0.000000e+00 : f32
    %58 = vector.broadcast %cst_16 : f32 to vector<8x32xf32>
    %59 = arith.minimumf %55, %58 : vector<8x32xf32>
    %60 = math.exp %59 : vector<8x32xf32>
    %cst_17 = arith.constant 1.000000e+00 : f32
    %61 = vector.broadcast %cst_17 : f32 to vector<8x32xf32>
    %62 = arith.subf %60, %61 : vector<8x32xf32>
    %63 = arith.select %57, %55, %62 : vector<8x32xi1>, vector<8x32xf32>
    %64 = arith.mulf %3, %63 : vector<8x32xf32>
    %65 = arith.mulf %6, %63 : vector<8x32xf32>
    %66 = arith.mulf %9, %63 : vector<8x32xf32>
    %67 = arith.mulf %12, %63 : vector<8x32xf32>
    %68 = tpu.concatenate %0, %64, %65, %66, %67 in 1 : vector<8x4xf32>, vector<8x32xf32>, vector<8x32xf32>, vector<8x32xf32>, vector<8x32xf32> -> vector<8x132xf32>
    %69 = arith.truncf %68 : vector<8x132xf32> to vector<8x132xbf16>
    %c0_18 = arith.constant 0 : index
    %c0_19 = arith.constant 0 : index
    %70 = vector.load %arg7[%c0_18, %c0_19] : memref<132x311xbf16, #tpu.memory_space<vmem>>, vector<132x311xbf16>
    %cst_20 = arith.constant dense<0.000000e+00> : vector<8x311xf32>
    %71 = tpu.matmul %69, %70, %cst_20 {dimension_numbers = #tpu.dot_dimension_numbers<[1], [0], [0], [1], [0, 0, 1, 1], [], []>} : vector<8x132xbf16>, vector<132x311xbf16>, vector<8x311xf32> -> vector<8x311xf32>
    %c0_21 = arith.constant 0 : index
    %c0_22 = arith.constant 0 : index
    %72 = vector.load %arg8[%c0_21, %c0_22] : memref<8x311xf32, #tpu.memory_space<vmem>>, vector<8x311xf32>
    tpu.vector_store %arg8[%c0_21, %c0_22], %71 {strides = array<i32>} : memref<8x311xf32, #tpu.memory_space<vmem>>, vector<8x311xf32>,
    return
  }
  func.func @transform_0(%arg0: i32) -> (i32, i32) {
    %c0_i32 = arith.constant 0 : i32
    %c0_i32_0 = arith.constant 0 : i32
    return %arg0, %c0_i32 : i32, i32
  }
  func.func @transform_1(%arg0: i32) -> (i32, i32) {
    %c0_i32 = arith.constant 0 : i32
    %c0_i32_0 = arith.constant 0 : i32
    return %arg0, %c0_i32 : i32, i32
  }
  func.func @transform_2(%arg0: i32) -> (i32, i32) {
    %c0_i32 = arith.constant 0 : i32
    %c0_i32_0 = arith.constant 0 : i32
    %c0_i32_1 = arith.constant 0 : i32
    return %c0_i32, %c0_i32_0 : i32, i32
  }
  func.func @transform_3(%arg0: i32) -> (i32, i32) {
    %c0_i32 = arith.constant 0 : i32
    %c0_i32_0 = arith.constant 0 : i32
    %c0_i32_1 = arith.constant 0 : i32
    return %c0_i32, %c0_i32_0 : i32, i32
  }
  func.func @transform_4(%arg0: i32) -> (i32, i32) {
    %c0_i32 = arith.constant 0 : i32
    %c0_i32_0 = arith.constant 0 : i32
    %c0_i32_1 = arith.constant 0 : i32
    return %c0_i32, %c0_i32_0 : i32, i32
  }
  func.func @transform_5(%arg0: i32) -> (i32, i32) {
    %c0_i32 = arith.constant 0 : i32
    %c0_i32_0 = arith.constant 0 : i32
    %c0_i32_1 = arith.constant 0 : i32
    return %c0_i32, %c0_i32_0 : i32, i32
  }
  func.func @transform_6(%arg0: i32) -> (i32, i32) {
    %c0_i32 = arith.constant 0 : i32
    %c0_i32_0 = arith.constant 0 : i32
    %c0_i32_1 = arith.constant 0 : i32
    return %c0_i32, %c0_i32_0 : i32, i32
  }
  func.func @transform_7(%arg0: i32) -> (i32, i32) {
    %c0_i32 = arith.constant 0 : i32
    %c0_i32_0 = arith.constant 0 : i32
    return %arg0, %c0_i32 : i32, i32
  }
}

</mosaic_0001>

<llo_original>
// kernel: char_control_forward.1
$region0: #{char_control_forward.1}
  #allocation0 [shape = 'u32[]', space=smem, size = 0x4, offset = 0x4, fixed_abs, tag = 'smem constant byte address 0x4 - core index']
  #allocation1 [shape = 'u32[144,128]{1,0:T(1,128)}', space=vmem, size = 0x12000, scoped, tag = 'internal scratch']
  %s0 = inlined_call_operand.vmem [shape: f32[8,4], index: 0, kind: input, shape index: {}]
  %s1 = inlined_call_operand.vmem [shape: f32[8,342], index: 1, kind: input, shape index: {}]
  %s2 = inlined_call_operand.hbm [shape: bf16[342,128], index: 2, kind: input, shape index: {}]
  %s3 = inlined_call_operand.vmem [shape: f32[1,128], index: 3, kind: input, shape index: {}]
  %s4 = inlined_call_operand.vmem [shape: bf16[32,128], index: 4, kind: input, shape index: {}]
  %s5 = inlined_call_operand.vmem [shape: f32[1,128], index: 5, kind: input, shape index: {}]
  %s6 = inlined_call_operand.hbm [shape: bf16[132,311], index: 6, kind: input, shape index: {}]
  %s7 = inlined_call_operand.hbm [shape: f32[8,311], index: 7, kind: output, shape index: {}]
  %s8 = sld [smem:[#allocation0]]
  $region46: #{char_control_forward.1} parent=0
    _
  %s10 = ssub.s32 1, %s8
  %s11 = scalar_select 0, %s10, %s8
  $region1: #{char_control_forward.1} parent=0
    #allocation2 [shape = 'u8[88064]{0}', space=vmem, size = 0x15800, scoped, tag = 'input window, operand 2, single buffered']
    #allocation3 [shape = 's32[1]{0}', space=sflag, size = 0x4, scoped, tag = 'scoped memory for char_control_forward.1']
    #allocation4 [shape = 's32[1]{0}', space=sflag, size = 0x4, scoped, tag = 'scoped memory for char_control_forward.1']
    #allocation5 [shape = 'u8[104448]{0}', space=vmem, size = 0x19800, scoped, tag = 'input window, operand 6, single buffered']
    #allocation6 [shape = 's32[1]{0}', space=sflag, size = 0x4, scoped, tag = 'scoped memory for char_control_forward.1']
    #allocation7 [shape = 'u8[12288]{0}', space=vmem, size = 0x3000, scoped, tag = 'output window, operand 0, single buffered']
    %12 = vsyncpa [#allocation3], 0
    %13 = vsyncpa [#allocation6], 0
    %14 = vsyncpa [#allocation4], 0
    // Predicated region
    $region2: #{char_control_forward.1} parent=1 // pred_check
      _
    $region3: #{char_control_forward.1} parent=1 // pred_check_branch
      %16 = sbr.rel (0) target = $region5
    $region4: #{char_control_forward.1} parent=1 // pred_region
      _
    $region5: #{char_control_forward.1} parent=1 // pred_fallthru
      _
    // Predicated region
    $region6: #{char_control_forward.1} parent=1 // pred_check
      _
    $region7: #{char_control_forward.1} parent=1 // pred_check_branch
      %18 = sbr.rel (0) target = $region9
    $region8: #{char_control_forward.1} parent=1 // pred_region
      _
    $region9: #{char_control_forward.1} parent=1 // pred_fallthru
      _
    // Predicated region
    $region10: #{char_control_forward.1} parent=1 // pred_check
      _
    $region11: #{char_control_forward.1} parent=1 // pred_check_branch
      %20 = sbr.rel (0) target = $region13
    $region12: #{char_control_forward.1} parent=1 // pred_region
      %s22 = ssub.s32 2752, 2752
      %23 = vsyncadd [#allocation3], %s22
      %s24 = sshll.u32 [#allocation2], 4
      %s25 = int_to_ptr.vmem [resolvable:$true] %s24
      %30 = dma.hbm_to_vmem [thread:$0]  %s2, 2752, %s25, [#allocation3], 64, 64, 4
    $region13: #{char_control_forward.1} parent=1 // pred_fallthru
      _
    // Predicated region
    $region14: #{char_control_forward.1} parent=1 // pred_check
      _
    $region15: #{char_control_forward.1} parent=1 // pred_check_branch
      %32 = sbr.rel (0) target = $region17
    $region16: #{char_control_forward.1} parent=1 // pred_region
      _
    $region17: #{char_control_forward.1} parent=1 // pred_fallthru
      _
    // Predicated region
    $region18: #{char_control_forward.1} parent=1 // pred_check
      _
    $region19: #{char_control_forward.1} parent=1 // pred_check_branch
      %34 = sbr.rel (0) target = $region21
    $region20: #{char_control_forward.1} parent=1 // pred_region
      _
    $region21: #{char_control_forward.1} parent=1 // pred_fallthru
      _
    // Predicated region
    $region22: #{char_control_forward.1} parent=1 // pred_check
      _
    $region23: #{char_control_forward.1} parent=1 // pred_check_branch
      %36 = sbr.rel (0) target = $region25
    $region24: #{char_control_forward.1} parent=1 // pred_region
      _
    $region25: #{char_control_forward.1} parent=1 // pred_fallthru
      _
    // Predicated region
    $region26: #{char_control_forward.1} parent=1 // pred_check
      _
    $region27: #{char_control_forward.1} parent=1 // pred_check_branch
      %38 = sbr.rel (0) target = $region29
    $region28: #{char_control_forward.1} parent=1 // pred_region
      %s40 = ssub.s32 3264, 3264
      %41 = vsyncadd [#allocation6], %s40
      %s42 = sshll.u32 [#allocation5], 4
      %s43 = int_to_ptr.vmem [resolvable:$true] %s42
      %48 = dma.hbm_to_vmem [thread:$0]  %s6, 3264, %s43, [#allocation6], 192, 192, 12
    $region29: #{char_control_forward.1} parent=1 // pred_fallthru
      _
    // Predicated region
    $region30: #{char_control_forward.1} parent=1 // pred_check
      _
    $region31: #{char_control_forward.1} parent=1 // pred_check_branch
      %50 = sbr.rel (0) target = $region33
    $region32: #{char_control_forward.1} parent=1 // pred_region
      %51 = dma.done [#allocation3], 2752
    $region33: #{char_control_forward.1} parent=1 // pred_fallthru
      _
    // Predicated region
    $region34: #{char_control_forward.1} parent=1 // pred_check
      _
    $region35: #{char_control_forward.1} parent=1 // pred_check_branch
      %53 = sbr.rel (0) target = $region37
    $region36: #{char_control_forward.1} parent=1 // pred_region
      %54 = dma.done [#allocation6], 3264
    $region37: #{char_control_forward.1} parent=1 // pred_fallthru
      _
    %v56 = vld [vmem:[%s0] sm:$0xff]
    %58 = vset.pattern.permute.xlu0 0
    %59 = vperm.xlu0 %58, %v56
    %v60 = vpop.permute.xlu0 %59
    %62 = vset.pattern.permute.xlu0 1
    %63 = vperm.xlu0 %62, %v56
    %v64 = vpop.permute.xlu0 %63
    %66 = vset.pattern.permute.xlu0 2
    %67 = vperm.xlu0 %66, %v56
    %v68 = vpop.permute.xlu0 %67
    %70 = vset.pattern.permute.xlu0 3
    %71 = vperm.xlu0 %70, %v56
    %v72 = vpop.permute.xlu0 %71
    %v74 = vld [vmem:[%s1] sm:$0xff]
    %v75 = vld [vmem:[%s1 + $0x8] sm:$0xff]
    %v76 = vld [vmem:[%s1 + $0x10] sm:$0xff]
    %v77 = vpack.c.bf16 %v74, %v74
    %v78 = vpack.c.bf16 %v75, %v75
    %v79 = vpack.c.bf16 %v76, %v76
    %v80 = vld [vmem:[#allocation2] sm:$0xf]
    %v81 = vld [vmem:[#allocation2 + $0x4] sm:$0xf]
    %v82 = vld [vmem:[#allocation2 + $0x8] sm:$0xf]
    %v83 = vld [vmem:[#allocation2 + $0xc] sm:$0xf]
    %v84 = vld [vmem:[#allocation2 + $0x10] sm:$0xf]
    %v85 = vld [vmem:[#allocation2 + $0x14] sm:$0xf]
    %v86 = vld [vmem:[#allocation2 + $0x18] sm:$0xf]
    %v87 = vld [vmem:[#allocation2 + $0x1c] sm:$0xf]
    %v88 = vld [vmem:[#allocation2 + $0x20] sm:$0xf]
    %v89 = vld [vmem:[#allocation2 + $0x24] sm:$0xf]
    %v90 = vld [vmem:[#allocation2 + $0x28] sm:$0xf]
    %v91 = vld [vmem:[#allocation2 + $0x2c] sm:$0xf]
    %v92 = vld [vmem:[#allocation2 + $0x30] sm:$0xf]
    %v93 = vld [vmem:[#allocation2 + $0x34] sm:$0xf]
    %v94 = vld [vmem:[#allocation2 + $0x38] sm:$0xf]
    %v95 = vld [vmem:[#allocation2 + $0x3c] sm:$0xf]
    %v96 = vld [vmem:[#allocation2 + $0x40] sm:$0xf]
    %v97 = vld [vmem:[#allocation2 + $0x44] sm:$0xf]
    %v98 = vld [vmem:[#allocation2 + $0x48] sm:$0xf]
    %v99 = vld [vmem:[#allocation2 + $0x4c] sm:$0xf]
    %v100 = vld [vmem:[#allocation2 + $0x50] sm:$0xf]
    %v101 = vld [vmem:[#allocation2 + $0x54] sm:$0xf]
    %v102 = vld [vmem:[#allocation2 + $0x58] sm:$0xf]
    %v103 = vld [vmem:[#allocation2 + $0x5c] sm:$0xf]
    %v104 = vld [vmem:[#allocation2 + $0x60] sm:$0xf]
    %v105 = vld [vmem:[#allocation2 + $0x64] sm:$0xf]
    %v106 = vld [vmem:[#allocation2 + $0x68] sm:$0xf]
    %v107 = vld [vmem:[#allocation2 + $0x6c] sm:$0xf]
    %v108 = vld [vmem:[#allocation2 + $0x70] sm:$0xf]
    %v109 = vld [vmem:[#allocation2 + $0x74] sm:$0xf]
    %v110 = vld [vmem:[#allocation2 + $0x78] sm:$0xf]
    %v111 = vld [vmem:[#allocation2 + $0x7c] sm:$0xf]
    %v112 = vld [vmem:[#allocation2 + $0x80] sm:$0xf]
    %v113 = vld [vmem:[#allocation2 + $0x84] sm:$0xf]
    %v114 = vld [vmem:[#allocation2 + $0x88] sm:$0xf]
    %v115 = vld [vmem:[#allocation2 + $0x8c] sm:$0xf]
    %v116 = vld [vmem:[#allocation2 + $0x90] sm:$0xf]
    %v117 = vld [vmem:[#allocation2 + $0x94] sm:$0xf]
    %v118 = vld [vmem:[#allocation2 + $0x98] sm:$0xf]
    %v119 = vld [vmem:[#allocation2 + $0x9c] sm:$0xf]
    %v120 = vld [vmem:[#allocation2 + $0xa0] sm:$0xf]
    %v121 = vld [vmem:[#allocation2 + $0xa4] sm:$0xf]
    %v122 = vld [vmem:[#allocation2 + $0xa8] sm:$0x7]
    %v123 = vld [vmem:[%s3] sm:$0x1]
    %v125 = vlaneseq
    %v126 = vshrl.u32 %v125, 7
    %v127 = vsub.s32 0, %v126
    %v128 = vrot.slane %v123, %v127
    %v173 = vunpack.c.l.b16 %v80
    %v174 = vunpack.c.l.b16 %v81
    %v175 = vunpack.c.l.b16 %v82
    %v176 = vunpack.c.l.b16 %v83
    %v177 = vunpack.c.l.b16 %v84
    %v178 = vunpack.c.l.b16 %v85
    %v179 = vunpack.c.l.b16 %v86
    %v180 = vunpack.c.l.b16 %v87
    %v181 = vunpack.c.l.b16 %v88
    %v182 = vunpack.c.l.b16 %v89
    %v183 = vunpack.c.l.b16 %v90
    %v184 = vunpack.c.l.b16 %v91
    %v185 = vunpack.c.l.b16 %v92
    %v186 = vunpack.c.l.b16 %v93
    %v187 = vunpack.c.l.b16 %v94
    %v188 = vunpack.c.l.b16 %v95
    %v189 = vunpack.c.l.b16 %v96
    %v190 = vunpack.c.l.b16 %v97
    %v191 = vunpack.c.l.b16 %v98
    %v192 = vunpack.c.l.b16 %v99
    %v193 = vunpack.c.l.b16 %v100
    %v194 = vunpack.c.l.b16 %v101
    %v195 = vunpack.c.l.b16 %v102
    %v196 = vunpack.c.l.b16 %v103
    %v197 = vunpack.c.l.b16 %v104
    %v198 = vunpack.c.l.b16 %v105
    %v199 = vunpack.c.l.b16 %v106
    %v200 = vunpack.c.l.b16 %v107
    %v201 = vunpack.c.l.b16 %v108
    %v202 = vunpack.c.l.b16 %v109
    %v203 = vunpack.c.l.b16 %v110
    %v204 = vunpack.c.l.b16 %v111
    %v205 = vunpack.c.l.b16 %v112
    %v206 = vunpack.c.l.b16 %v113
    %v207 = vunpack.c.l.b16 %v114
    %v208 = vunpack.c.l.b16 %v115
    %v209 = vunpack.c.l.b16 %v116
    %v210 = vunpack.c.l.b16 %v117
    %v211 = vunpack.c.l.b16 %v118
    %v212 = vunpack.c.l.b16 %v119
    %v213 = vunpack.c.l.b16 %v120
    %v214 = vunpack.c.l.b16 %v121
    %v215 = vunpack.c.l.b16 %v122
    %v216 = vpack.c.b16 %v174, %v173
    %v217 = vpack.c.b16 %v176, %v175
    %v218 = vpack.c.b16 %v178, %v177
    %v219 = vpack.c.b16 %v180, %v179
    %v220 = vpack.c.b16 %v182, %v181
    %v221 = vpack.c.b16 %v184, %v183
    %v222 = vpack.c.b16 %v186, %v185
    %v223 = vpack.c.b16 %v188, %v187
    %v224 = vpack.c.b16 %v190, %v189
    %v225 = vpack.c.b16 %v192, %v191
    %v226 = vpack.c.b16 %v194, %v193
    %v227 = vpack.c.b16 %v196, %v195
    %v228 = vpack.c.b16 %v198, %v197
    %v229 = vpack.c.b16 %v200, %v199
    %v230 = vpack.c.b16 %v202, %v201
    %v231 = vpack.c.b16 %v204, %v203
    %v232 = vpack.c.b16 %v206, %v205
    %v233 = vpack.c.b16 %v208, %v207
    %v234 = vpack.c.b16 %v210, %v209
    %v235 = vpack.c.b16 %v212, %v211
    %v236 = vpack.c.b16 %v214, %v213
    %v237 = vpack.c.b16 %v215, %v215
    %vm259 = vcmask 703488
    %v261 = vsel %vm259, %v79, 0
    %vm263 = vcmask 1042432
    %v265 = vsel %vm263, %v237, 0
    %267 = vmatprep.subr.bf16.mxu0 0
    %268 = vmatpush1.bf16.msra.mxu0 %v216
    %269 = vmatprep.subr.bf16.mxu0 0
    %270 = vmatpush1.bf16.msra.mxu0 %v217
    %271 = vmatprep.subr.bf16.mxu0 0
    %272 = vmatpush1.bf16.msra.mxu0 %v218
    %273 = vmatprep.subr.bf16.mxu0 0
    %274 = vmatpush1.bf16.msra.mxu0 %v219
    %275 = vmatprep.subr.bf16.mxu0 0
    %276 = vmatpush1.bf16.msra.mxu0 %v220
    %277 = vmatprep.subr.bf16.mxu0 0
    %278 = vmatpush1.bf16.msra.mxu0 %v221
    %279 = vmatprep.subr.bf16.mxu0 0
    %280 = vmatpush1.bf16.msra.mxu0 %v222
    %281 = vmatprep.subr.bf16.mxu0 0
    %282 = vmatpush1.bf16.msra.mxu0 %v223
    %283 = vmatprep.subr.bf16.mxu0 0
    %284 = vmatpush1.bf16.msra.mxu0 %v224
    %285 = vmatprep.subr.bf16.mxu0 0
    %286 = vmatpush1.bf16.msra.mxu0 %v225
    %287 = vmatprep.subr.bf16.mxu0 0
    %288 = vmatpush1.bf16.msra.mxu0 %v226
    %289 = vmatprep.subr.bf16.mxu0 0
    %290 = vmatpush1.bf16.msra.mxu0 %v227
    %291 = vmatprep.subr.bf16.mxu0 0
    %292 = vmatpush1.bf16.msra.mxu0 %v228
    %293 = vmatprep.subr.bf16.mxu0 0
    %294 = vmatpush1.bf16.msra.mxu0 %v229
    %295 = vmatprep.subr.bf16.mxu0 0
    %296 = vmatpush1.bf16.msra.mxu0 %v230
    %297 = vmatprep.subr.bf16.mxu0 0
    %298 = vmatpush1.bf16.msra.mxu0 %v231
    %299 = vmatprep.mubr.bf16.mxu0 %v78
    %300 = vmatmul.mubr.bf16.gmra.mrb[0].mxu0 %v77
    %v301 = vpop.f32.mrb[0].mxu0
    %v302 = vadd.f32 %v128, %v301
    %v303 = vpop.f32.mrb[0].mxu0
    %v304 = vpop.f32.mrb[0].mxu0
    %v305 = vpop.f32.mrb[0].mxu0
    %306 = vdwg.mxu0
    %307 = vmatprep.subr.bf16.mxu0 0
    %308 = vmatpush1.bf16.msra.mxu0 %v232
    %309 = vmatprep.subr.bf16.mxu0 0
    %310 = vmatpush1.bf16.msra.mxu0 %v233
    %311 = vmatprep.subr.bf16.mxu0 0
    %312 = vmatpush1.bf16.msra.mxu0 %v234
    %313 = vmatprep.subr.bf16.mxu0 0
    %314 = vmatpush1.bf16.msra.mxu0 %v235
    %315 = vmatprep.subr.bf16.mxu0 0
    %316 = vmatpush1.bf16.msra.mxu0 %v236
    %317 = vmatprep.subr.bf16.mxu0 0
    %318 = vmatpush1.bf16.msra.mxu0 %v265
    %319 = vmatprep.subr.bf16.mxu0 0
    %320 = vmatpush1.bf16.msra.mxu0 0
    %321 = vmatprep.subr.bf16.mxu0 0
    %322 = vmatpush1.bf16.msra.mxu0 0
    %323 = vmatprep.subr.bf16.mxu0 0
    %324 = vmatpush1.bf16.msra.mxu0 0
    %325 = vmatprep.subr.bf16.mxu0 0
    %326 = vmatpush1.bf16.msra.mxu0 0
    %327 = vmatprep.subr.bf16.mxu0 0
    %328 = vmatpush1.bf16.msra.mxu0 0
    %329 = vmatprep.subr.bf16.mxu0 0
    %330 = vmatpush1.bf16.msra.mxu0 0
    %331 = vmatprep.subr.bf16.mxu0 0
    %332 = vmatpush1.bf16.msra.mxu0 0
    %333 = vmatprep.subr.bf16.mxu0 0
    %334 = vmatpush1.bf16.msra.mxu0 0
    %335 = vmatprep.subr.bf16.mxu0 0
    %336 = vmatpush1.bf16.msra.mxu0 0
    %337 = vmatprep.subr.bf16.mxu0 0
    %338 = vmatpush1.bf16.msra.mxu0 0
    %339 = vmatprep.mubr.bf16.mxu0 0
    %340 = vmatmul.mubr.bf16.gmra.mrb[0].mxu0 %v261
    %v341 = vpop.f32.mrb[0].mxu0
    %v342 = vadd.f32 %v302, %v341
    %v343 = vpop.f32.mrb[0].mxu0
    %v344 = vpop.f32.mrb[0].mxu0
    %v345 = vpop.f32.mrb[0].mxu0
    %346 = vdwg.mxu0
    %v347 = vmul.f32 %v60, %v342
    %v348 = vmul.f32 %v64, %v342
    %350 = vrot.lane.b32.xlu0 %v348, 96
    %v351 = vpop.permute.xlu0 %350
    %v353 = vadd.f32 %v347, %v351
    %v354 = vmul.f32 %v68, %v342
    %356 = vrot.lane.b32.xlu0 %v354, 64
    %v357 = vpop.permute.xlu0 %356
    %v359 = vadd.f32 %v353, %v357
    %v360 = vmul.f32 %v72, %v342
    %362 = vrot.lane.b32.xlu0 %v360, 32
    %v363 = vpop.permute.xlu0 %362
    %v365 = vadd.f32 %v359, %v363
    %vm366 = vcmp.gt.f32.partialorder %v365, 0.0
    %v367 = vmin.f32 %v365, 0.0
    %v368 = vmul.f32 %v367, 1.442695
    %v369 = vpow.pop %v368
    %v370 = vsub.f32 %v369, 1.0
    %v371 = vsel %vm366, %v365, %v370
    %v372 = vpack.c.bf16 %v371, %v371
    %v373 = vld [vmem:[%s4] sm:$0xf]
    %v374 = vld [vmem:[%s4 + $0x4] sm:$0xf]
    %v375 = vld [vmem:[%s4 + $0x8] sm:$0xf]
    %v376 = vld [vmem:[%s4 + $0xc] sm:$0xf]
    %v377 = vld [vmem:[%s5] sm:$0x1]
    %v379 = vlaneseq
    %v380 = vshrl.u32 %v379, 7
    %v381 = vsub.s32 0, %v380
    %v382 = vrot.slane %v377, %v381
    %v388 = vunpack.c.l.b16 %v373
    %v389 = vunpack.c.l.b16 %v374
    %v390 = vunpack.c.l.b16 %v375
    %v391 = vunpack.c.l.b16 %v376
    %v392 = vpack.c.b16 %v389, %v388
    %v393 = vpack.c.b16 %v391, %v390
    %vm396 = vcmask 261120
    %v398 = vsel %vm396, %v372, 0
    %400 = vmatprep.subr.bf16.mxu0 0
    %401 = vmatpush1.bf16.msra.mxu0 %v392
    %402 = vmatprep.subr.bf16.mxu0 0
    %403 = vmatpush1.bf16.msra.mxu0 %v393
    %404 = vmatprep.subr.bf16.mxu0 0
    %405 = vmatpush1.bf16.msra.mxu0 0
    %406 = vmatprep.subr.bf16.mxu0 0
    %407 = vmatpush1.bf16.msra.mxu0 0
    %408 = vmatprep.subr.bf16.mxu0 0
    %409 = vmatpush1.bf16.msra.mxu0 0
    %410 = vmatprep.subr.bf16.mxu0 0
    %411 = vmatpush1.bf16.msra.mxu0 0
    %412 = vmatprep.subr.bf16.mxu0 0
    %413 = vmatpush1.bf16.msra.mxu0 0
    %414 = vmatprep.subr.bf16.mxu0 0
    %415 = vmatpush1.bf16.msra.mxu0 0
    %416 = vmatprep.subr.bf16.mxu0 0
    %417 = vmatpush1.bf16.msra.mxu0 0
    %418 = vmatprep.subr.bf16.mxu0 0
    %419 = vmatpush1.bf16.msra.mxu0 0
    %420 = vmatprep.subr.bf16.mxu0 0
    %421 = vmatpush1.bf16.msra.mxu0 0
    %422 = vmatprep.subr.bf16.mxu0 0
    %423 = vmatpush1.bf16.msra.mxu0 0
    %424 = vmatprep.subr.bf16.mxu0 0
    %425 = vmatpush1.bf16.msra.mxu0 0
    %426 = vmatprep.subr.bf16.mxu0 0
    %427 = vmatpush1.bf16.msra.mxu0 0
    %428 = vmatprep.subr.bf16.mxu0 0
    %429 = vmatpush1.bf16.msra.mxu0 0
    %430 = vmatprep.subr.bf16.mxu0 0
    %431 = vmatpush1.bf16.msra.mxu0 0
    %432 = vmatprep.mubr.bf16.mxu0 0
    %433 = vmatmul.mubr.bf16.gmra.mrb[0].mxu0 %v398
    %v434 = vpop.f32.mrb[0].mxu0
    %v435 = vadd.f32 %v382, %v434
    %v436 = vpop.f32.mrb[0].mxu0
    %v437 = vpop.f32.mrb[0].mxu0
    %v438 = vpop.f32.mrb[0].mxu0
    %439 = vdwg.mxu0
    %v440 = vmul.f32 %v60, %v435
    %v441 = vmul.f32 %v64, %v435
    %443 = vrot.lane.b32.xlu0 %v441, 96
    %v444 = vpop.permute.xlu0 %443
    %v446 = vadd.f32 %v440, %v444
    %v447 = vmul.f32 %v68, %v435
    %449 = vrot.lane.b32.xlu0 %v447, 64
    %v450 = vpop.permute.xlu0 %449
    %v452 = vadd.f32 %v446, %v450
    %v453 = vmul.f32 %v72, %v435
    %455 = vrot.lane.b32.xlu0 %v453, 32
    %v456 = vpop.permute.xlu0 %455
    %v458 = vadd.f32 %v452, %v456
    %vm459 = vcmp.gt.f32.partialorder %v458, 0.0
    %v460 = vmin.f32 %v458, 0.0
    %v461 = vmul.f32 %v460, 1.442695
    %v462 = vpow.pop %v461
    %v463 = vsub.f32 %v462, 1.0
    %v464 = vsel %vm459, %v458, %v463
    %v465 = vmul.f32 %v60, %v464
    %v466 = vmul.f32 %v64, %v464
    %v467 = vmul.f32 %v68, %v464
    %v468 = vmul.f32 %v72, %v464
    %470 = vrot.lane.b32.xlu0 %v465, 4
    %v471 = vpop.permute.xlu0 %470
    %474 = vrot.lane.b32.xlu0 %v466, 36
    %v475 = vpop.permute.xlu0 %474
    %478 = vrot.lane.b32.xlu0 %v467, 68
    %v479 = vpop.permute.xlu0 %478
    %482 = vrot.lane.b32.xlu0 %v468, 100
    %v483 = vpop.permute.xlu0 %482
    %vm485 = vcmask 31744
    %v486 = vsel %vm485, %v56, %v471
    %vm487 = vcmask 293888
    %v488 = vsel %vm487, %v486, %v475
    %vm489 = vcmask 556032
    %v490 = vsel %vm489, %v488, %v479
    %vm491 = vcmask 818176
    %v492 = vsel %vm491, %v490, %v483
    %v493 = vpack.c.bf16 %v492, %v492
    %v494 = vpack.c.bf16 %v483, %v483
    %v495 = vld [vmem:[#allocation5] sm:$0xff]
    %v496 = vld [vmem:[#allocation5 + $0x8] sm:$0xf]
    %v497 = vld [vmem:[#allocation5 + $0xc] sm:$0xff]
    %v498 = vld [vmem:[#allocation5 + $0x14] sm:$0xf]
    %v499 = vld [vmem:[#allocation5 + $0x18] sm:$0xff]
    %v500 = vld [vmem:[#allocation5 + $0x20] sm:$0xf]
    %v501 = vld [vmem:[#allocation5 + $0x24] sm:$0xff]
    %v502 = vld [vmem:[#allocation5 + $0x2c] sm:$0xf]
    %v503 = vld [vmem:[#allocation5 + $0x30] sm:$0xff]
    %v504 = vld [vmem:[#allocation5 + $0x38] sm:$0xf]
    %v505 = vld [vmem:[#allocation5 + $0x3c] sm:$0xff]
    %v506 = vld [vmem:[#allocation5 + $0x44] sm:$0xf]
    %v507 = vld [vmem:[#allocation5 + $0x48] sm:$0xff]
    %v508 = vld [vmem:[#allocation5 + $0x50] sm:$0xf]
    %v509 = vld [vmem:[#allocation5 + $0x54] sm:$0xff]
    %v510 = vld [vmem:[#allocation5 + $0x5c] sm:$0xf]
    %v511 = vld [vmem:[#allocation5 + $0x60] sm:$0xff]
    %v512 = vld [vmem:[#allocation5 + $0x68] sm:$0xf]
    %v513 = vld [vmem:[#allocation5 + $0x6c] sm:$0xff]
    %v514 = vld [vmem:[#allocation5 + $0x74] sm:$0xf]
    %v515 = vld [vmem:[#allocation5 + $0x78] sm:$0xff]
    %v516 = vld [vmem:[#allocation5 + $0x80] sm:$0xf]
    %v517 = vld [vmem:[#allocation5 + $0x84] sm:$0xff]
    %v518 = vld [vmem:[#allocation5 + $0x8c] sm:$0xf]
    %v519 = vld [vmem:[#allocation5 + $0x90] sm:$0xff]
    %v520 = vld [vmem:[#allocation5 + $0x98] sm:$0xf]
    %v521 = vld [vmem:[#allocation5 + $0x9c] sm:$0xff]
    %v522 = vld [vmem:[#allocation5 + $0xa4] sm:$0xf]
    %v523 = vld [vmem:[#allocation5 + $0xa8] sm:$0xff]
    %v524 = vld [vmem:[#allocation5 + $0xb0] sm:$0xf]
    %v525 = vld [vmem:[#allocation5 + $0xb4] sm:$0xff]
    %v526 = vld [vmem:[#allocation5 + $0xbc] sm:$0xf]
    %v527 = vld [vmem:[#allocation5 + $0xc0] sm:$0x33]
    %v528 = vld [vmem:[#allocation5 + $0xc8] sm:$0x3]
    %v563 = vunpack.c.l.b16 %v495
    %v564 = vunpack.c.h.b16 %v495
    %v565 = vunpack.c.l.b16 %v496
    %v566 = vunpack.c.l.b16 %v497
    %v567 = vunpack.c.h.b16 %v497
    %v568 = vunpack.c.l.b16 %v498
    %v569 = vunpack.c.l.b16 %v499
    %v570 = vunpack.c.h.b16 %v499
    %v571 = vunpack.c.l.b16 %v500
    %v572 = vunpack.c.l.b16 %v501
    %v573 = vunpack.c.h.b16 %v501
    %v574 = vunpack.c.l.b16 %v502
    %v575 = vunpack.c.l.b16 %v503
    %v576 = vunpack.c.h.b16 %v503
    %v577 = vunpack.c.l.b16 %v504
    %v578 = vunpack.c.l.b16 %v505
    %v579 = vunpack.c.h.b16 %v505
    %v580 = vunpack.c.l.b16 %v506
    %v581 = vunpack.c.l.b16 %v507
    %v582 = vunpack.c.h.b16 %v507
    %v583 = vunpack.c.l.b16 %v508
    %v584 = vunpack.c.l.b16 %v509
    %v585 = vunpack.c.h.b16 %v509
    %v586 = vunpack.c.l.b16 %v510
    %v587 = vunpack.c.l.b16 %v511
    %v588 = vunpack.c.h.b16 %v511
    %v589 = vunpack.c.l.b16 %v512
    %v590 = vunpack.c.l.b16 %v513
    %v591 = vunpack.c.h.b16 %v513
    %v592 = vunpack.c.l.b16 %v514
    %v593 = vunpack.c.l.b16 %v515
    %v594 = vunpack.c.h.b16 %v515
    %v595 = vunpack.c.l.b16 %v516
    %v596 = vunpack.c.l.b16 %v517
    %v597 = vunpack.c.h.b16 %v517
    %v598 = vunpack.c.l.b16 %v518
    %v599 = vunpack.c.l.b16 %v519
    %v600 = vunpack.c.h.b16 %v519
    %v601 = vunpack.c.l.b16 %v520
    %v602 = vunpack.c.l.b16 %v521
    %v603 = vunpack.c.h.b16 %v521
    %v604 = vunpack.c.l.b16 %v522
    %v605 = vunpack.c.l.b16 %v523
    %v606 = vunpack.c.h.b16 %v523
    %v607 = vunpack.c.l.b16 %v524
    %v608 = vunpack.c.l.b16 %v525
    %v609 = vunpack.c.h.b16 %v525
    %v610 = vunpack.c.l.b16 %v526
    %v611 = vunpack.c.l.b16 %v527
    %v612 = vunpack.c.h.b16 %v527
    %v613 = vunpack.c.l.b16 %v528
    %v614 = vpack.c.b16 %v566, %v563
    %v615 = vpack.c.b16 %v567, %v564
    %v616 = vpack.c.b16 %v568, %v565
    %v617 = vpack.c.b16 %v572, %v569
    %v618 = vpack.c.b16 %v573, %v570
    %v619 = vpack.c.b16 %v574, %v571
    %v620 = vpack.c.b16 %v578, %v575
    %v621 = vpack.c.b16 %v579, %v576
    %v622 = vpack.c.b16 %v580, %v577
    %v623 = vpack.c.b16 %v584, %v581
    %v624 = vpack.c.b16 %v585, %v582
    %v625 = vpack.c.b16 %v586, %v583
    %v626 = vpack.c.b16 %v590, %v587
    %v627 = vpack.c.b16 %v591, %v588
    %v628 = vpack.c.b16 %v592, %v589
    %v629 = vpack.c.b16 %v596, %v593
    %v630 = vpack.c.b16 %v597, %v594
    %v631 = vpack.c.b16 %v598, %v595
    %v632 = vpack.c.b16 %v602, %v599
    %v633 = vpack.c.b16 %v603, %v600
    %v634 = vpack.c.b16 %v604, %v601
    %v635 = vpack.c.b16 %v608, %v605
    %v636 = vpack.c.b16 %v609, %v606
    %v637 = vpack.c.b16 %v610, %v607
    %v638 = vpack.c.b16 %v611, %v611
    %v639 = vpack.c.b16 %v612, %v612
    %v640 = vpack.c.b16 %v613, %v613
    %v666 = vsel %vm485, %v494, 0
    %vm668 = vcmask 1041408
    %v670 = vsel %vm668, %v638, 0
    %v673 = vsel %vm668, %v639, 0
    %v676 = vsel %vm668, %v640, 0
    %678 = vmatprep.subr.bf16.mxu0 %v615
    %679 = vmatpush1.bf16.msra.mxu0 %v614
    %680 = vmatprep.subr.bf16.mxu0 %v618
    %681 = vmatpush1.bf16.msra.mxu0 %v617
    %682 = vmatprep.subr.bf16.mxu0 %v621
    %683 = vmatpush1.bf16.msra.mxu0 %v620
    %684 = vmatprep.subr.bf16.mxu0 %v624
    %685 = vmatpush1.bf16.msra.mxu0 %v623
    %686 = vmatprep.subr.bf16.mxu0 %v627
    %687 = vmatpush1.bf16.msra.mxu0 %v626
    %688 = vmatprep.subr.bf16.mxu0 %v630
    %689 = vmatpush1.bf16.msra.mxu0 %v629
    %690 = vmatprep.subr.bf16.mxu0 %v633
    %691 = vmatpush1.bf16.msra.mxu0 %v632
    %692 = vmatprep.subr.bf16.mxu0 %v636
    %693 = vmatpush1.bf16.msra.mxu0 %v635
    %694 = vmatprep.subr.bf16.mxu0 %v673
    %695 = vmatpush1.bf16.msra.mxu0 %v670
    %696 = vmatprep.subr.bf16.mxu0 0
    %697 = vmatpush1.bf16.msra.mxu0 0
    %698 = vmatprep.subr.bf16.mxu0 0
    %699 = vmatpush1.bf16.msra.mxu0 0
    %700 = vmatprep.subr.bf16.mxu0 0
    %701 = vmatpush1.bf16.msra.mxu0 0
    %702 = vmatprep.subr.bf16.mxu0 0
    %703 = vmatpush1.bf16.msra.mxu0 0
    %704 = vmatprep.subr.bf16.mxu0 0
    %705 = vmatpush1.bf16.msra.mxu0 0
    %706 = vmatprep.subr.bf16.mxu0 0
    %707 = vmatpush1.bf16.msra.mxu0 0
    %708 = vmatprep.subr.bf16.mxu0 0
    %709 = vmatpush1.bf16.msra.mxu0 0
    %710 = vmatprep.mubr.bf16.mxu0 %v666
    %711 = vmatmul.mubr.bf16.gmra.mrb[0].mxu0 %v493
    %v712 = vpop.f32.mrb[0].mxu0
    %v713 = vadd.f32 0.0, %v712
    %v714 = vpop.f32.mrb[0].mxu0
    %v715 = vadd.f32 0.0, %v714
    %v716 = vpop.f32.mrb[0].mxu0
    %v717 = vpop.f32.mrb[0].mxu0
    %718 = vdwg.mxu0
    %719 = vmatprep.subr.bf16.mxu0 0
    %720 = vmatpush1.bf16.msra.mxu0 %v616
    %721 = vmatprep.subr.bf16.mxu0 0
    %722 = vmatpush1.bf16.msra.mxu0 %v619
    %723 = vmatprep.subr.bf16.mxu0 0
    %724 = vmatpush1.bf16.msra.mxu0 %v622
    %725 = vmatprep.subr.bf16.mxu0 0
    %726 = vmatpush1.bf16.msra.mxu0 %v625
    %727 = vmatprep.subr.bf16.mxu0 0
    %728 = vmatpush1.bf16.msra.mxu0 %v628
    %729 = vmatprep.subr.bf16.mxu0 0
    %730 = vmatpush1.bf16.msra.mxu0 %v631
    %731 = vmatprep.subr.bf16.mxu0 0
    %732 = vmatpush1.bf16.msra.mxu0 %v634
    %733 = vmatprep.subr.bf16.mxu0 0
    %734 = vmatpush1.bf16.msra.mxu0 %v637
    %735 = vmatprep.subr.bf16.mxu0 0
    %736 = vmatpush1.bf16.msra.mxu0 %v676
    %737 = vmatprep.subr.bf16.mxu0 0
    %738 = vmatpush1.bf16.msra.mxu0 0
    %739 = vmatprep.subr.bf16.mxu0 0
    %740 = vmatpush1.bf16.msra.mxu0 0
    %741 = vmatprep.subr.bf16.mxu0 0
    %742 = vmatpush1.bf16.msra.mxu0 0
    %743 = vmatprep.subr.bf16.mxu0 0
    %744 = vmatpush1.bf16.msra.mxu0 0
    %745 = vmatprep.subr.bf16.mxu0 0
    %746 = vmatpush1.bf16.msra.mxu0 0
    %747 = vmatprep.subr.bf16.mxu0 0
    %748 = vmatpush1.bf16.msra.mxu0 0
    %749 = vmatprep.subr.bf16.mxu0 0
    %750 = vmatpush1.bf16.msra.mxu0 0
    %751 = vmatprep.mubr.bf16.mxu0 %v666
    %752 = vmatmul.mubr.bf16.gmra.mrb[0].mxu0 %v493
    %v753 = vpop.f32.mrb[0].mxu0
    %v754 = vadd.f32 0.0, %v753
    %v755 = vpop.f32.mrb[0].mxu0
    %v756 = vpop.f32.mrb[0].mxu0
    %v757 = vpop.f32.mrb[0].mxu0
    %758 = vdwg.mxu0
    %759 = vst [vmem:[#allocation7] sm:$0xff] %v713
    %760 = vst [vmem:[#allocation7 + $0x8] sm:$0xff] %v715
    %vm761 = vcmask 449536
    %762 = vst.msk [vmem:[#allocation7 + $0x10] sm:$0xff] %vm761, %v754
    // Predicated region
    $region38: #{char_control_forward.1} parent=1 // pred_check
      _
    $region39: #{char_control_forward.1} parent=1 // pred_check_branch
      %764 = sbr.rel (0) target = $region41
    $region40: #{char_control_forward.1} parent=1 // pred_region
      %s766 = ssub.s32 384, 384
      %767 = vsyncadd [#allocation4], %s766
      %s769 = sshll.u32 [#allocation7], 4
      %s770 = int_to_ptr.vmem [resolvable:$true] %s769
      %772 = dma.vmem_to_hbm [thread:$0]  %s770, 384, %s7, [#allocation4]
    $region41: #{char_control_forward.1} parent=1 // pred_fallthru
      _
    // Predicated region
    $region42: #{char_control_forward.1} parent=1 // pred_check
      _
    $region43: #{char_control_forward.1} parent=1 // pred_check_branch
      %774 = sbr.rel (0) target = $region45
    $region44: #{char_control_forward.1} parent=1 // pred_region
      %775 = dma.done [#allocation4], 384
    $region45: #{char_control_forward.1} parent=1 // pred_fallthru
      _
    %776 = vsyncpa [#allocation3], 1
    %777 = vsyncpa [#allocation6], 1
    %778 = vsyncpa [#allocation4], 1

</llo_original>
